<compile_context>
chip_gen: v6e
topology: v6e:2x2x1
jax: 0.10.0
libtpu: 0.0.40
codegen_flags: <defaults>
</compile_context>

<pallas_src>
import functools

import jax
import jax.numpy as jnp
from jax.experimental import pallas as pl
from jax.experimental.pallas import tpu as pltpu


# ----------------------------- kernels ------------------------------------- #

def _mlp_res_kernel(emb_ref, ef_ref, w1_ref, b1_ref, wr_ref, br_ref,
                    w2_ref, b2_ref, out_ref):
    # fc1 + ReLU (hid padded to a lane-dense multiple of 128)
    h = jnp.dot(emb_ref[...], w1_ref[...], preferred_element_type=jnp.float32)
    h = jnp.maximum(h + b1_ref[...], 0.0)
    # residual branch: fc_residual(edge_feats)
    h = h + jnp.dot(ef_ref[...], wr_ref[...],
                    preferred_element_type=jnp.float32) + br_ref[...]
    # fc2 (class dim padded to a multiple of 128 -> unmasked full-lane store)
    out = jnp.dot(h.astype(w2_ref.dtype), w2_ref[...],
                  preferred_element_type=jnp.float32) + b2_ref[...]
    out_ref[...] = out.astype(out_ref.dtype)


def _mlp_kernel(emb_ref, w1_ref, b1_ref, w2_ref, b2_ref, out_ref):
    h = jnp.dot(emb_ref[...], w1_ref[...], preferred_element_type=jnp.float32)
    h = jnp.maximum(h + b1_ref[...], 0.0)
    out = jnp.dot(h.astype(w2_ref.dtype), w2_ref[...],
                  preferred_element_type=jnp.float32) + b2_ref[...]
    out_ref[...] = out.astype(out_ref.dtype)


# ----------------------------- helpers ------------------------------------- #

def _round_up(x, m):
    return ((x + m - 1) // m) * m


def _cdiv(a, b):
    return -(-a // b)


def _vmem_capacity_bytes():
    """Physical VMEM per TensorCore; conservative 64 MiB (v7x) fallback."""
    try:
        return int(pltpu.get_tpu_info().vmem_capacity_bytes)
    except Exception:
        return 64 << 20


def _plan_tiles(n, ft_in, in_feats_eff, hid_p, ncls_p, itemsize,
                budget_bytes, tm_max=1024, tm_floor=128):
    """Pick a batch tile (multiple of 8) and padded batch size.

    Accounts for double-buffered activation/output tiles, the (tm, hid_p)
    intermediate, and weights counted *twice* (Pallas double-buffers even
    constant-index blocks).  Tile count is balanced against the batch so
    padding waste stays small, with >=2 tiles for large batches (v7x megacore).
    """
    weight_elems = (ft_in * hid_p + in_feats_eff * hid_p + hid_p * ncls_p
                    + 2 * hid_p + ncls_p)
    resident = 2 * weight_elems * itemsize          # x2: double-buffered blocks
    avail = max(budget_bytes - resident, 1 << 20)
    per_row = (2 * (ft_in + in_feats_eff + ncls_p) + 2 * hid_p) * itemsize
    tm_cap = max(8, min(tm_max, ((avail // per_row) // 8) * 8))

    min_tiles = 2 if n >= 256 else 1                # let v7x's 2 TCs both work
    num_tiles = max(min_tiles, _cdiv(n, tm_cap))
    tm = _round_up(_cdiv(n, num_tiles), 8)
    tm = max(8, min(tm, tm_cap))
    if n >= tm_floor and tm_cap >= tm_floor:        # full-height MXU tiles
        tm = max(tm, tm_floor)
    num_tiles = _cdiv(n, tm)
    n_pad = num_tiles * tm
    return int(tm), int(n_pad)


def init_mlp_params(key, ft_in, hid, nb_classes, in_feats, dtype=jnp.float32):
    """Xavier-uniform weights, zero biases (matches the module's weights_init)."""
    def xavier(k, fan_in, fan_out):
        bound = jnp.sqrt(6.0 / (fan_in + fan_out))
        # stored as (in, out) == W.T of the PyTorch (out, in) weight
        return jax.random.uniform(k, (fan_in, fan_out), dtype,
                                  minval=-bound, maxval=bound)

    k1, k2, k3 = jax.random.split(key, 3)
    return {
        "w1": xavier(k1, ft_in, hid),
        "b1": jnp.zeros((1, hid), dtype),
        "w2": xavier(k2, hid, nb_classes),
        "b2": jnp.zeros((1, nb_classes), dtype),
        "wr": xavier(k3, in_feats, hid),
        "br": jnp.zeros((1, hid), dtype),
    }


def prepare_mlp_params(params, use_bf16=False):
    """One-time padding of weights (hoisted out of the per-call forward).

    hid and nb_classes are zero-padded to multiples of 128 so both matmuls are
    lane/MXU aligned; padding is numerically exact (zeros stay zero through
    ReLU, residual add and the fc2 contraction).
    """
    ft_in, hid = params["w1"].shape
    nb_classes = params["w2"].shape[1]
    in_feats = params["wr"].shape[0]
    hid_p = _round_up(hid, 128)
    ncls_p = _round_up(nb_classes, 128)
    dh, dc = hid_p - hid, ncls_p - nb_classes

    wdt = jnp.bfloat16 if use_bf16 else params["w1"].dtype
    prepped = {
        "w1": jnp.pad(params["w1"], ((0, 0), (0, dh))).astype(wdt),
        "b1": jnp.pad(params["b1"], ((0, 0), (0, dh))),
        "wr": jnp.pad(params["wr"], ((0, 0), (0, dh))).astype(wdt),
        "br": jnp.pad(params["br"], ((0, 0), (0, dh))),
        "w2": jnp.pad(params["w2"], ((0, dh), (0, dc))).astype(wdt),
        "b2": jnp.pad(params["b2"], ((0, 0), (0, dc))),
    }
    return prepped


# ----------------------------- forward ------------------------------------- #

@functools.partial(jax.jit, static_argnames=("has_edge_feats", "nb_classes"))
def mlp_forward(params, emb, edge_feats=None, *, has_edge_feats=False,
                nb_classes=None):
    """Forward pass. `params` must come from prepare_mlp_params()."""
    if has_edge_feats and edge_feats is None:
        raise ValueError("has_edge_feats=True but edge_feats is None")

    n, ft_in = emb.shape
    hid_p = params["w1"].shape[1]
    ncls_p = params["w2"].shape[1]
    in_feats = params["wr"].shape[0]
    if nb_classes is None:
        nb_classes = ncls_p

    compute_dtype = params["w1"].dtype
    out_dtype = emb.dtype
    itemsize = jnp.dtype(compute_dtype).itemsize

    capacity = _vmem_capacity_bytes()
    budget = int(0.55 * capacity)
    vmem_limit = int(0.85 * capacity)

    in_feats_eff = in_feats if has_edge_feats else 0
    tm, n_pad = _plan_tiles(n, ft_in, in_feats_eff, hid_p, ncls_p,
                            itemsize, budget)
    emb_p = jnp.pad(emb, ((0, n_pad - n), (0, 0))).astype(compute_dtype)
    grid = (n_pad // tm,)

    def row_spec(cols):
        return pl.BlockSpec((tm, cols), lambda i: (i, 0))

    def const_spec(shape):
        return pl.BlockSpec(shape, lambda i: (0, 0))

    out_shape = jax.ShapeDtypeStruct((n_pad, ncls_p), out_dtype)
    out_spec = pl.BlockSpec((tm, ncls_p), lambda i: (i, 0))

    compiler_params = pltpu.CompilerParams(
        dimension_semantics=("parallel",),
        vmem_limit_bytes=vmem_limit,
    )

    flops = 2 * n_pad * (ft_in * hid_p + hid_p * ncls_p)
    bytes_accessed = itemsize * (n_pad * ft_in + ft_in * hid_p + hid_p * ncls_p
                                 + 2 * hid_p + ncls_p) + 4 * n_pad * ncls_p

    if has_edge_feats:
        ef_p = jnp.pad(edge_feats, ((0, n_pad - n), (0, 0))).astype(compute_dtype)
        flops += 2 * n_pad * in_feats * hid_p
        bytes_accessed += itemsize * (n_pad * in_feats + in_feats * hid_p + hid_p)
        out = pl.pallas_call(
            _mlp_res_kernel,
            out_shape=out_shape,
            grid=grid,
            in_specs=[
                row_spec(ft_in),               # emb tile
                row_spec(in_feats),            # edge_feats tile
                const_spec((ft_in, hid_p)),    # w1 (VMEM-resident)
                const_spec((1, hid_p)),        # b1
                const_spec((in_feats, hid_p)),  # wr
                const_spec((1, hid_p)),        # br
                const_spec((hid_p, ncls_p)),   # w2 (padded)
                const_spec((1, ncls_p)),       # b2 (padded)
            ],
            out_specs=out_spec,
            compiler_params=compiler_params,
            cost_estimate=pl.CostEstimate(flops=flops, transcendentals=0,
                                          bytes_accessed=bytes_accessed),
        )(emb_p, ef_p, params["w1"], params["b1"],
          params["wr"], params["br"], params["w2"], params["b2"])
    else:
        out = pl.pallas_call(
            _mlp_kernel,
            out_shape=out_shape,
            grid=grid,
            in_specs=[
                row_spec(ft_in),               # emb tile
                const_spec((ft_in, hid_p)),    # w1
                const_spec((1, hid_p)),        # b1
                const_spec((hid_p, ncls_p)),   # w2 (padded)
                const_spec((1, ncls_p)),       # b2 (padded)
            ],
            out_specs=out_spec,
            compiler_params=compiler_params,
            cost_estimate=pl.CostEstimate(flops=flops, transcendentals=0,
                                          bytes_accessed=bytes_accessed),
        )(emb_p, params["w1"], params["b1"], params["w2"], params["b2"])

    # Slice away the batch padding and the zero-padded class lanes.
    return out[:n, :nb_classes]


def mlp_reference(params, emb, edge_feats=None):
    h = jnp.maximum(emb @ params["w1"] + params["b1"], 0.0)
    if edge_feats is not None:
        h = h + edge_feats @ params["wr"] + params["br"]
    return h @ params["w2"] + params["b2"]


# ----------------------------- test ---------------------------------------- #

if __name__ == "__main__":
    key = jax.random.PRNGKey(0)
    k_param, k_emb, k_ef = jax.random.split(key, 3)

    # Small shapes consistent with the module's forward:
    #   emb: (batch, ft_in), edge_feats: (batch, in_feats)
    batch, ft_in, hid, nb_classes, in_feats = 8, 32, 32, 16, 24

    raw_params = init_mlp_params(k_param, ft_in, hid, nb_classes, in_feats)
    params = prepare_mlp_params(raw_params)          # one-time padding (f32 path)
    emb = jax.random.normal(k_emb, (batch, ft_in), jnp.float32)
    edge_feats = jax.random.normal(k_ef, (batch, in_feats), jnp.float32)

    # Path with the optional residual branch (edge_feats provided).
    out_res = mlp_forward(params, emb, edge_feats,
                          has_edge_feats=True, nb_classes=nb_classes)
    out_res = jax.block_until_ready(out_res)
    ref_res = mlp_reference(raw_params, emb, edge_feats)
    assert out_res.shape == (batch, nb_classes)
    assert jnp.allclose(out_res, ref_res, atol=1e-5, rtol=1e-5)

    # Path without edge_feats (edge_feats is None in the PyTorch forward).
    out_plain = mlp_forward(params, emb, has_edge_feats=False,
                            nb_classes=nb_classes)
    out_plain = jax.block_until_ready(out_plain)
    ref_plain = mlp_reference(raw_params, emb, None)
    assert out_plain.shape == (batch, nb_classes)
    assert jnp.allclose(out_plain, ref_plain, atol=1e-5, rtol=1e-5)

    print("KERNEL_OK")
</pallas_src>

<mosaic_0001>
module attributes {stable_mosaic.version = 11 : i64} {
  func.func @_mlp_res_kernel(%arg0: i32, %arg1: memref<8x32xf32, #tpu.memory_space<vmem>>, %arg2: memref<8x24xf32, #tpu.memory_space<vmem>>, %arg3: memref<32x128xf32, #tpu.memory_space<vmem>>, %arg4: memref<1x128xf32, #tpu.memory_space<vmem>>, %arg5: memref<24x128xf32, #tpu.memory_space<vmem>>, %arg6: memref<1x128xf32, #tpu.memory_space<vmem>>, %arg7: memref<128x128xf32, #tpu.memory_space<vmem>>, %arg8: memref<1x128xf32, #tpu.memory_space<vmem>>, %arg9: memref<8x128xf32, #tpu.memory_space<vmem>>) attributes {dimension_semantics = [#tpu.dimension_semantics<parallel>], iteration_bounds = array<i64: 1>, scalar_prefetch = 0 : i64, scratch_operands = 0 : i64, tpu.core_type = #tpu.core_type<tc>, window_params = [{transform_indices = @transform_0, window_bounds = array<i64: 8, 32>}, {transform_indices = @transform_1, window_bounds = array<i64: 8, 24>}, {pipeline_mode = #tpu.pipeline_mode<synchronous>, transform_indices = @transform_2, window_bounds = array<i64: 32, 128>}, {pipeline_mode = #tpu.pipeline_mode<synchronous>, transform_indices = @transform_3, window_bounds = array<i64: 1, 128>}, {pipeline_mode = #tpu.pipeline_mode<synchronous>, transform_indices = @transform_4, window_bounds = array<i64: 24, 128>}, {pipeline_mode = #tpu.pipeline_mode<synchronous>, transform_indices = @transform_5, window_bounds = array<i64: 1, 128>}, {pipeline_mode = #tpu.pipeline_mode<synchronous>, transform_indices = @transform_6, window_bounds = array<i64: 128, 128>}, {pipeline_mode = #tpu.pipeline_mode<synchronous>, transform_indices = @transform_7, window_bounds = array<i64: 1, 128>}, {transform_indices = @transform_8, window_bounds = array<i64: 8, 128>}]} {
    %c0 = arith.constant 0 : index
    %c0_0 = arith.constant 0 : index
    %0 = vector.load %arg1[%c0, %c0_0] : memref<8x32xf32, #tpu.memory_space<vmem>>, vector<8x32xf32>
    %c0_1 = arith.constant 0 : index
    %c0_2 = arith.constant 0 : index
    %1 = vector.load %arg3[%c0_1, %c0_2] : memref<32x128xf32, #tpu.memory_space<vmem>>, vector<32x128xf32>
    %cst = arith.constant dense<0.000000e+00> : vector<8x128xf32>
    %2 = tpu.matmul %0, %1, %cst {dimension_numbers = #tpu.dot_dimension_numbers<[1], [0], [0], [1], [0, 0, 1, 1], [], []>} : vector<8x32xf32>, vector<32x128xf32>, vector<8x128xf32> -> vector<8x128xf32>
    %c0_3 = arith.constant 0 : index
    %c0_4 = arith.constant 0 : index
    %3 = vector.load %arg4[%c0_3, %c0_4] : memref<1x128xf32, #tpu.memory_space<vmem>>, vector<1x128xf32>
    %4 = vector.broadcast %3 : vector<1x128xf32> to vector<8x128xf32>
    %5 = arith.addf %2, %4 : vector<8x128xf32>
    %cst_5 = arith.constant 0.000000e+00 : f32
    %6 = vector.broadcast %cst_5 : f32 to vector<8x128xf32>
    %7 = arith.maximumf %5, %6 : vector<8x128xf32>
    %c0_6 = arith.constant 0 : index
    %c0_7 = arith.constant 0 : index
    %8 = vector.load %arg2[%c0_6, %c0_7] : memref<8x24xf32, #tpu.memory_space<vmem>>, vector<8x24xf32>
    %c0_8 = arith.constant 0 : index
    %c0_9 = arith.constant 0 : index
    %9 = vector.load %arg5[%c0_8, %c0_9] : memref<24x128xf32, #tpu.memory_space<vmem>>, vector<24x128xf32>
    %cst_10 = arith.constant dense<0.000000e+00> : vector<8x128xf32>
    %10 = tpu.matmul %8, %9, %cst_10 {dimension_numbers = #tpu.dot_dimension_numbers<[1], [0], [0], [1], [0, 0, 1, 1], [], []>} : vector<8x24xf32>, vector<24x128xf32>, vector<8x128xf32> -> vector<8x128xf32>
    %11 = arith.addf %7, %10 : vector<8x128xf32>
    %c0_11 = arith.constant 0 : index
    %c0_12 = arith.constant 0 : index
    %12 = vector.load %arg6[%c0_11, %c0_12] : memref<1x128xf32, #tpu.memory_space<vmem>>, vector<1x128xf32>
    %13 = vector.broadcast %12 : vector<1x128xf32> to vector<8x128xf32>
    %14 = arith.addf %11, %13 : vector<8x128xf32>
    %c0_13 = arith.constant 0 : index
    %c0_14 = arith.constant 0 : index
    %15 = vector.load %arg7[%c0_13, %c0_14] : memref<128x128xf32, #tpu.memory_space<vmem>>, vector<128x128xf32>
    %cst_15 = arith.constant dense<0.000000e+00> : vector<8x128xf32>
    %16 = tpu.matmul %14, %15, %cst_15 {dimension_numbers = #tpu.dot_dimension_numbers<[1], [0], [0], [1], [0, 0, 1, 1], [], []>} : vector<8x128xf32>, vector<128x128xf32>, vector<8x128xf32> -> vector<8x128xf32>
    %c0_16 = arith.constant 0 : index
    %c0_17 = arith.constant 0 : index
    %17 = vector.load %arg8[%c0_16, %c0_17] : memref<1x128xf32, #tpu.memory_space<vmem>>, vector<1x128xf32>
    %18 = vector.broadcast %17 : vector<1x128xf32> to vector<8x128xf32>
    %19 = arith.addf %16, %18 : vector<8x128xf32>
    %c0_18 = arith.constant 0 : index
    %c0_19 = arith.constant 0 : index
    %20 = vector.load %arg9[%c0_18, %c0_19] : memref<8x128xf32, #tpu.memory_space<vmem>>, vector<8x128xf32>
    tpu.vector_store %arg9[%c0_18, %c0_19], %19 {strides = array<i32>} : memref<8x128xf32, #tpu.memory_space<vmem>>, vector<8x128xf32>,
    return
  }
  func.func @transform_0(%arg0: i32) -> (i32, i32) {
    %c0_i32 = arith.constant 0 : i32
    %c0_i32_0 = arith.constant 0 : i32
    return %arg0, %c0_i32 : i32, i32
  }
  func.func @transform_1(%arg0: i32) -> (i32, i32) {
    %c0_i32 = arith.constant 0 : i32
    %c0_i32_0 = arith.constant 0 : i32
    return %arg0, %c0_i32 : i32, i32
  }
  func.func @transform_2(%arg0: i32) -> (i32, i32) {
    %c0_i32 = arith.constant 0 : i32
    %c0_i32_0 = arith.constant 0 : i32
    %c0_i32_1 = arith.constant 0 : i32
    return %c0_i32, %c0_i32_0 : i32, i32
  }
  func.func @transform_3(%arg0: i32) -> (i32, i32) {
    %c0_i32 = arith.constant 0 : i32
    %c0_i32_0 = arith.constant 0 : i32
    %c0_i32_1 = arith.constant 0 : i32
    return %c0_i32, %c0_i32_0 : i32, i32
  }
  func.func @transform_4(%arg0: i32) -> (i32, i32) {
    %c0_i32 = arith.constant 0 : i32
    %c0_i32_0 = arith.constant 0 : i32
    %c0_i32_1 = arith.constant 0 : i32
    return %c0_i32, %c0_i32_0 : i32, i32
  }
  func.func @transform_5(%arg0: i32) -> (i32, i32) {
    %c0_i32 = arith.constant 0 : i32
    %c0_i32_0 = arith.constant 0 : i32
    %c0_i32_1 = arith.constant 0 : i32
    return %c0_i32, %c0_i32_0 : i32, i32
  }
  func.func @transform_6(%arg0: i32) -> (i32, i32) {
    %c0_i32 = arith.constant 0 : i32
    %c0_i32_0 = arith.constant 0 : i32
    %c0_i32_1 = arith.constant 0 : i32
    return %c0_i32, %c0_i32_0 : i32, i32
  }
  func.func @transform_7(%arg0: i32) -> (i32, i32) {
    %c0_i32 = arith.constant 0 : i32
    %c0_i32_0 = arith.constant 0 : i32
    %c0_i32_1 = arith.constant 0 : i32
    return %c0_i32, %c0_i32_0 : i32, i32
  }
  func.func @transform_8(%arg0: i32) -> (i32, i32) {
    %c0_i32 = arith.constant 0 : i32
    %c0_i32_0 = arith.constant 0 : i32
    return %arg0, %c0_i32 : i32, i32
  }
}

</mosaic_0001>

<llo_original>
// kernel: mlp_forward.1
$region0: #{mlp_forward.1}
  #allocation0 [shape = 'u32[]', space=smem, size = 0x4, offset = 0x4, fixed_abs, tag = 'smem constant byte address 0x4 - core index']
  #allocation1 [shape = 'u32[144,128]{1,0:T(1,128)}', space=vmem, size = 0x12000, scoped, tag = 'internal scratch']
  %s0 = inlined_call_operand.vmem [shape: f32[8,32], index: 0, kind: input, shape index: {}]
  %s1 = inlined_call_operand.hbm [shape: f32[8,24], index: 1, kind: input, shape index: {}]
  %s2 = inlined_call_operand.hbm [shape: f32[32,128], index: 2, kind: input, shape index: {}]
  %s3 = inlined_call_operand.hbm [shape: f32[1,128], index: 3, kind: input, shape index: {}]
  %s4 = inlined_call_operand.hbm [shape: f32[24,128], index: 4, kind: input, shape index: {}]
  %s5 = inlined_call_operand.vmem [shape: f32[1,128], index: 5, kind: input, shape index: {}]
  %s6 = inlined_call_operand.hbm [shape: f32[128,128], index: 6, kind: input, shape index: {}]
  %s7 = inlined_call_operand.hbm [shape: f32[1,128], index: 7, kind: input, shape index: {}]
  %s8 = inlined_call_operand.hbm [shape: f32[8,128], index: 8, kind: output, shape index: {}]
  %s9 = sld [smem:[#allocation0]]
  $region66: #{mlp_forward.1} parent=0
    _
  %s11 = ssub.s32 1, %s9
  %s12 = scalar_select 0, %s11, %s9
  $region1: #{mlp_forward.1} parent=0
    #allocation2 [shape = 'u8[4096]{0}', space=vmem, size = 0x1000, scoped, tag = 'input window, operand 1, single buffered']
    #allocation3 [shape = 's32[1]{0}', space=sflag, size = 0x4, scoped, tag = 'scoped memory for mlp_forward.1']
    #allocation4 [shape = 's32[1]{0}', space=sflag, size = 0x4, scoped, tag = 'scoped memory for mlp_forward.1']
    #allocation5 [shape = 'u8[16384]{0}', space=vmem, size = 0x4000, scoped, tag = 'input window, operand 2, single buffered']
    #allocation6 [shape = 's32[1]{0}', space=sflag, size = 0x4, scoped, tag = 'scoped memory for mlp_forward.1']
    #allocation7 [shape = 'u8[512]{0}', space=vmem, size = 0x400, scoped, tag = 'input window, operand 3, single buffered']
    #allocation8 [shape = 'u8[12288]{0}', space=vmem, size = 0x3000, scoped, tag = 'input window, operand 4, single buffered']
    #allocation9 [shape = 's32[1]{0}', space=sflag, size = 0x4, scoped, tag = 'scoped memory for mlp_forward.1']
    #allocation10 [shape = 'u8[65536]{0}', space=vmem, size = 0x10000, scoped, tag = 'input window, operand 6, single buffered']
    #allocation11 [shape = 'u8[512]{0}', space=vmem, size = 0x400, scoped, tag = 'input window, operand 7, single buffered']
    #allocation12 [shape = 's32[1]{0}', space=sflag, size = 0x4, scoped, tag = 'scoped memory for mlp_forward.1']
    #allocation13 [shape = 'u8[4096]{0}', space=vmem, size = 0x1000, scoped, tag = 'output window, operand 0, single buffered']
    %13 = vsyncpa [#allocation3], 0
    %14 = vsyncpa [#allocation6], 0
    %15 = vsyncpa [#allocation9], 0
    %16 = vsyncpa [#allocation12], 0
    %17 = vsyncpa [#allocation4], 0
    // Predicated region
    $region2: #{mlp_forward.1} parent=1 // pred_check
      _
    $region3: #{mlp_forward.1} parent=1 // pred_check_branch
      %19 = sbr.rel (0) target = $region5
    $region4: #{mlp_forward.1} parent=1 // pred_region
      _
    $region5: #{mlp_forward.1} parent=1 // pred_fallthru
      _
    // Predicated region
    $region6: #{mlp_forward.1} parent=1 // pred_check
      _
    $region7: #{mlp_forward.1} parent=1 // pred_check_branch
      %21 = sbr.rel (0) target = $region9
    $region8: #{mlp_forward.1} parent=1 // pred_region
      %s23 = ssub.s32 128, 128
      %24 = vsyncadd [#allocation3], %s23
      %s26 = sshll.u32 [#allocation2], 4
      %s27 = int_to_ptr.vmem [resolvable:$true] %s26
      %29 = dma.hbm_to_vmem [thread:$0]  %s1, 128, %s27, [#allocation3]
    $region9: #{mlp_forward.1} parent=1 // pred_fallthru
      _
    // Predicated region
    $region10: #{mlp_forward.1} parent=1 // pred_check
      _
    $region11: #{mlp_forward.1} parent=1 // pred_check_branch
      %31 = sbr.rel (0) target = $region13
    $region12: #{mlp_forward.1} parent=1 // pred_region
      %s33 = ssub.s32 512, 512
      %34 = vsyncadd [#allocation6], %s33
      %s35 = sshll.u32 [#allocation5], 4
      %s36 = int_to_ptr.vmem [resolvable:$true] %s35
      %41 = dma.hbm_to_vmem [thread:$0]  %s2, 512, %s36, [#allocation6], 128, 128, 8
    $region13: #{mlp_forward.1} parent=1 // pred_fallthru
      _
    // Predicated region
    $region14: #{mlp_forward.1} parent=1 // pred_check
      _
    $region15: #{mlp_forward.1} parent=1 // pred_check_branch
      %43 = sbr.rel (0) target = $region17
    $region16: #{mlp_forward.1} parent=1 // pred_region
      %s45 = ssub.s32 16, 16
      %46 = vsyncadd [#allocation6], %s45
      %s48 = sshll.u32 [#allocation7], 4
      %s49 = int_to_ptr.vmem [resolvable:$true] %s48
      %51 = dma.hbm_to_vmem [thread:$0]  %s3, 16, %s49, [#allocation6]
    $region17: #{mlp_forward.1} parent=1 // pred_fallthru
      _
    // Predicated region
    $region18: #{mlp_forward.1} parent=1 // pred_check
      _
    $region19: #{mlp_forward.1} parent=1 // pred_check_branch
      %53 = sbr.rel (0) target = $region21
    $region20: #{mlp_forward.1} parent=1 // pred_region
      %s55 = ssub.s32 384, 384
      %56 = vsyncadd [#allocation9], %s55
      %s57 = sshll.u32 [#allocation8], 4
      %s58 = int_to_ptr.vmem [resolvable:$true] %s57
      %63 = dma.hbm_to_vmem [thread:$0]  %s4, 384, %s58, [#allocation9], 128, 128, 8
    $region21: #{mlp_forward.1} parent=1 // pred_fallthru
      _
    // Predicated region
    $region22: #{mlp_forward.1} parent=1 // pred_check
      _
    $region23: #{mlp_forward.1} parent=1 // pred_check_branch
      %65 = sbr.rel (0) target = $region25
    $region24: #{mlp_forward.1} parent=1 // pred_region
      _
    $region25: #{mlp_forward.1} parent=1 // pred_fallthru
      _
    // Predicated region
    $region26: #{mlp_forward.1} parent=1 // pred_check
      _
    $region27: #{mlp_forward.1} parent=1 // pred_check_branch
      %67 = sbr.rel (0) target = $region29
    $region28: #{mlp_forward.1} parent=1 // pred_region
      %s69 = ssub.s32 2048, 2048
      %70 = vsyncadd [#allocation9], %s69
      %s71 = sshll.u32 [#allocation10], 4
      %s72 = int_to_ptr.vmem [resolvable:$true] %s71
      %77 = dma.hbm_to_vmem [thread:$0]  %s6, 2048, %s72, [#allocation9], 128, 128, 8
    $region29: #{mlp_forward.1} parent=1 // pred_fallthru
      _
    // Predicated region
    $region30: #{mlp_forward.1} parent=1 // pred_check
      _
    $region31: #{mlp_forward.1} parent=1 // pred_check_branch
      %79 = sbr.rel (0) target = $region33
    $region32: #{mlp_forward.1} parent=1 // pred_region
      %s81 = ssub.s32 16, 16
      %82 = vsyncadd [#allocation12], %s81
      %s84 = sshll.u32 [#allocation11], 4
      %s85 = int_to_ptr.vmem [resolvable:$true] %s84
      %87 = dma.hbm_to_vmem [thread:$0]  %s7, 16, %s85, [#allocation12]
    $region33: #{mlp_forward.1} parent=1 // pred_fallthru
      _
    // Predicated region
    $region34: #{mlp_forward.1} parent=1 // pred_check
      _
    $region35: #{mlp_forward.1} parent=1 // pred_check_branch
      %89 = sbr.rel (0) target = $region37
    $region36: #{mlp_forward.1} parent=1 // pred_region
      %90 = dma.done [#allocation3], 128
    $region37: #{mlp_forward.1} parent=1 // pred_fallthru
      _
    // Predicated region
    $region38: #{mlp_forward.1} parent=1 // pred_check
      _
    $region39: #{mlp_forward.1} parent=1 // pred_check_branch
      %92 = sbr.rel (0) target = $region41
    $region40: #{mlp_forward.1} parent=1 // pred_region
      %93 = dma.done [#allocation6], 512
    $region41: #{mlp_forward.1} parent=1 // pred_fallthru
      _
    // Predicated region
    $region42: #{mlp_forward.1} parent=1 // pred_check
      _
    $region43: #{mlp_forward.1} parent=1 // pred_check_branch
      %95 = sbr.rel (0) target = $region45
    $region44: #{mlp_forward.1} parent=1 // pred_region
      %96 = dma.done [#allocation6], 16
    $region45: #{mlp_forward.1} parent=1 // pred_fallthru
      _
    // Predicated region
    $region46: #{mlp_forward.1} parent=1 // pred_check
      _
    $region47: #{mlp_forward.1} parent=1 // pred_check_branch
      %98 = sbr.rel (0) target = $region49
    $region48: #{mlp_forward.1} parent=1 // pred_region
      %99 = dma.done [#allocation9], 384
    $region49: #{mlp_forward.1} parent=1 // pred_fallthru
      _
    // Predicated region
    $region50: #{mlp_forward.1} parent=1 // pred_check
      _
    $region51: #{mlp_forward.1} parent=1 // pred_check_branch
      %101 = sbr.rel (0) target = $region53
    $region52: #{mlp_forward.1} parent=1 // pred_region
      %102 = dma.done [#allocation9], 2048
    $region53: #{mlp_forward.1} parent=1 // pred_fallthru
      _
    // Predicated region
    $region54: #{mlp_forward.1} parent=1 // pred_check
      _
    $region55: #{mlp_forward.1} parent=1 // pred_check_branch
      %104 = sbr.rel (0) target = $region57
    $region56: #{mlp_forward.1} parent=1 // pred_region
      %105 = dma.done [#allocation12], 16
    $region57: #{mlp_forward.1} parent=1 // pred_fallthru
      _
    %v106 = vld [vmem:[%s0] sm:$0xff]
    %v107 = vld [vmem:[#allocation5] sm:$0xff]
    %v108 = vld [vmem:[#allocation5 + $0x8] sm:$0xff]
    %v109 = vld [vmem:[#allocation5 + $0x10] sm:$0xff]
    %v110 = vld [vmem:[#allocation5 + $0x18] sm:$0xff]
    %v111 = vld [vmem:[#allocation7] sm:$0x1]
    %v113 = vlaneseq
    %v114 = vshrl.u32 %v113, 7
    %v115 = vsub.s32 0, %v114
    %v116 = vrot.slane %v111, %v115
    %vm118 = vcmask 261120
    %v120 = vsel %vm118, %v106, 0
    %122 = vmatprep.subr.mxu0 0.0
    %123 = vmatpush1.msra.mxu0 0.0
    %124 = vmatprep.subr.mxu0 0.0
    %125 = vmatpush1.msra.mxu0 0.0
    %126 = vmatprep.subr.mxu0 0.0
    %127 = vmatpush1.msra.mxu0 0.0
    %128 = vmatprep.subr.mxu0 0.0
    %129 = vmatpush1.msra.mxu0 0.0
    %130 = vmatprep.subr.mxu0 0.0
    %131 = vmatpush1.msra.mxu0 0.0
    %132 = vmatprep.subr.mxu0 0.0
    %133 = vmatpush1.msra.mxu0 0.0
    %134 = vmatprep.subr.mxu0 0.0
    %135 = vmatpush1.msra.mxu0 0.0
    %136 = vmatprep.subr.mxu0 0.0
    %137 = vmatpush1.msra.mxu0 0.0
    %138 = vmatprep.subr.mxu0 0.0
    %139 = vmatpush1.msra.mxu0 0.0
    %140 = vmatprep.subr.mxu0 0.0
    %141 = vmatpush1.msra.mxu0 0.0
    %142 = vmatprep.subr.mxu0 0.0
    %143 = vmatpush1.msra.mxu0 0.0
    %144 = vmatprep.subr.mxu0 0.0
    %145 = vmatpush1.msra.mxu0 0.0
    %146 = vmatprep.subr.mxu0 0.0
    %147 = vmatpush1.msra.mxu0 %v110
    %148 = vmatprep.subr.mxu0 0.0
    %149 = vmatpush1.msra.mxu0 %v109
    %150 = vmatprep.subr.mxu0 0.0
    %151 = vmatpush1.msra.mxu0 %v108
    %152 = vmatprep.subr.mxu0 0.0
    %153 = vmatpush1.msra.mxu0 %v107
    %154 = vmatprep.subr.mxu0 0.0
    %155 = vmatpush2.msra.mxu0 0.0
    %156 = vmatprep.subr.mxu0 0.0
    %157 = vmatpush2.msra.mxu0 0.0
    %158 = vmatprep.subr.mxu0 0.0
    %159 = vmatpush2.msra.mxu0 0.0
    %160 = vmatprep.subr.mxu0 0.0
    %161 = vmatpush2.msra.mxu0 0.0
    %162 = vmatprep.subr.mxu0 0.0
    %163 = vmatpush2.msra.mxu0 0.0
    %164 = vmatprep.subr.mxu0 0.0
    %165 = vmatpush2.msra.mxu0 0.0
    %166 = vmatprep.subr.mxu0 0.0
    %167 = vmatpush2.msra.mxu0 0.0
    %168 = vmatprep.subr.mxu0 0.0
    %169 = vmatpush2.msra.mxu0 0.0
    %170 = vmatprep.subr.mxu0 0.0
    %171 = vmatpush2.msra.mxu0 0.0
    %172 = vmatprep.subr.mxu0 0.0
    %173 = vmatpush2.msra.mxu0 0.0
    %174 = vmatprep.subr.mxu0 0.0
    %175 = vmatpush2.msra.mxu0 0.0
    %176 = vmatprep.subr.mxu0 0.0
    %177 = vmatpush2.msra.mxu0 0.0
    %178 = vmatprep.subr.mxu0 0.0
    %179 = vmatpush2.msra.mxu0 0.0
    %180 = vmatprep.subr.mxu0 0.0
    %181 = vmatpush2.msra.mxu0 0.0
    %182 = vmatprep.subr.mxu0 0.0
    %183 = vmatpush2.msra.mxu0 0.0
    %184 = vmatprep.subr.mxu0 0.0
    %185 = vmatpush2.msra.mxu0 0.0
    %186 = vmatprep.mubr.f32.mxu0 0.0
    %187 = vmatmul.mubr.f32.gmra.mxu0 %v120
    %v188 = vpop.f32.mrf.mxu0
    %v189 = vadd.f32 %v116, %v188
    %v190 = vpop.f32.mrf.mxu0
    %191 = vdwg.mxu0
    %v192 = vmax.f32 %v189, 0.0
    %v193 = vld [vmem:[#allocation2] sm:$0xff]
    %v194 = vld [vmem:[#allocation8] sm:$0xff]
    %v195 = vld [vmem:[#allocation8 + $0x8] sm:$0xff]
    %v196 = vld [vmem:[#allocation8 + $0x10] sm:$0xff]
    %vm197 = vcmask 195584
    %v199 = vsel %vm197, %v193, 0
    %201 = vmatprep.subr.mxu0 0.0
    %202 = vmatpush1.msra.mxu0 0.0
    %203 = vmatprep.subr.mxu0 0.0
    %204 = vmatpush1.msra.mxu0 0.0
    %205 = vmatprep.subr.mxu0 0.0
    %206 = vmatpush1.msra.mxu0 0.0
    %207 = vmatprep.subr.mxu0 0.0
    %208 = vmatpush1.msra.mxu0 0.0
    %209 = vmatprep.subr.mxu0 0.0
    %210 = vmatpush1.msra.mxu0 0.0
    %211 = vmatprep.subr.mxu0 0.0
    %212 = vmatpush1.msra.mxu0 0.0
    %213 = vmatprep.subr.mxu0 0.0
    %214 = vmatpush1.msra.mxu0 0.0
    %215 = vmatprep.subr.mxu0 0.0
    %216 = vmatpush1.msra.mxu0 0.0
    %217 = vmatprep.subr.mxu0 0.0
    %218 = vmatpush1.msra.mxu0 0.0
    %219 = vmatprep.subr.mxu0 0.0
    %220 = vmatpush1.msra.mxu0 0.0
    %221 = vmatprep.subr.mxu0 0.0
    %222 = vmatpush1.msra.mxu0 0.0
    %223 = vmatprep.subr.mxu0 0.0
    %224 = vmatpush1.msra.mxu0 0.0
    %225 = vmatprep.subr.mxu0 0.0
    %226 = vmatpush1.msra.mxu0 0.0
    %227 = vmatprep.subr.mxu0 0.0
    %228 = vmatpush1.msra.mxu0 %v196
    %229 = vmatprep.subr.mxu0 0.0
    %230 = vmatpush1.msra.mxu0 %v195
    %231 = vmatprep.subr.mxu0 0.0
    %232 = vmatpush1.msra.mxu0 %v194
    %233 = vmatprep.subr.mxu0 0.0
    %234 = vmatpush2.msra.mxu0 0.0
    %235 = vmatprep.subr.mxu0 0.0
    %236 = vmatpush2.msra.mxu0 0.0
    %237 = vmatprep.subr.mxu0 0.0
    %238 = vmatpush2.msra.mxu0 0.0
    %239 = vmatprep.subr.mxu0 0.0
    %240 = vmatpush2.msra.mxu0 0.0
    %241 = vmatprep.subr.mxu0 0.0
    %242 = vmatpush2.msra.mxu0 0.0
    %243 = vmatprep.subr.mxu0 0.0
    %244 = vmatpush2.msra.mxu0 0.0
    %245 = vmatprep.subr.mxu0 0.0
    %246 = vmatpush2.msra.mxu0 0.0
    %247 = vmatprep.subr.mxu0 0.0
    %248 = vmatpush2.msra.mxu0 0.0
    %249 = vmatprep.subr.mxu0 0.0
    %250 = vmatpush2.msra.mxu0 0.0
    %251 = vmatprep.subr.mxu0 0.0
    %252 = vmatpush2.msra.mxu0 0.0
    %253 = vmatprep.subr.mxu0 0.0
    %254 = vmatpush2.msra.mxu0 0.0
    %255 = vmatprep.subr.mxu0 0.0
    %256 = vmatpush2.msra.mxu0 0.0
    %257 = vmatprep.subr.mxu0 0.0
    %258 = vmatpush2.msra.mxu0 0.0
    %259 = vmatprep.subr.mxu0 0.0
    %260 = vmatpush2.msra.mxu0 0.0
    %261 = vmatprep.subr.mxu0 0.0
    %262 = vmatpush2.msra.mxu0 0.0
    %263 = vmatprep.subr.mxu0 0.0
    %264 = vmatpush2.msra.mxu0 0.0
    %265 = vmatprep.mubr.f32.mxu0 0.0
    %266 = vmatmul.mubr.f32.gmra.mxu0 %v199
    %v267 = vpop.f32.mrf.mxu0
    %v268 = vadd.f32 0.0, %v267
    %v269 = vpop.f32.mrf.mxu0
    %270 = vdwg.mxu0
    %v271 = vadd.f32 %v192, %v268
    %v272 = vld [vmem:[%s5] sm:$0x1]
    %v274 = vlaneseq
    %v275 = vshrl.u32 %v274, 7
    %v276 = vsub.s32 0, %v275
    %v277 = vrot.slane %v272, %v276
    %v279 = vadd.f32 %v271, %v277
    %v280 = vld [vmem:[#allocation10] sm:$0xff]
    %v281 = vld [vmem:[#allocation10 + $0x8] sm:$0xff]
    %v282 = vld [vmem:[#allocation10 + $0x10] sm:$0xff]
    %v283 = vld [vmem:[#allocation10 + $0x18] sm:$0xff]
    %v284 = vld [vmem:[#allocation10 + $0x20] sm:$0xff]
    %v285 = vld [vmem:[#allocation10 + $0x28] sm:$0xff]
    %v286 = vld [vmem:[#allocation10 + $0x30] sm:$0xff]
    %v287 = vld [vmem:[#allocation10 + $0x38] sm:$0xff]
    %v288 = vld [vmem:[#allocation10 + $0x40] sm:$0xff]
    %v289 = vld [vmem:[#allocation10 + $0x48] sm:$0xff]
    %v290 = vld [vmem:[#allocation10 + $0x50] sm:$0xff]
    %v291 = vld [vmem:[#allocation10 + $0x58] sm:$0xff]
    %v292 = vld [vmem:[#allocation10 + $0x60] sm:$0xff]
    %v293 = vld [vmem:[#allocation10 + $0x68] sm:$0xff]
    %v294 = vld [vmem:[#allocation10 + $0x70] sm:$0xff]
    %v295 = vld [vmem:[#allocation10 + $0x78] sm:$0xff]
    %v296 = vld [vmem:[#allocation11] sm:$0x1]
    %v298 = vlaneseq
    %v299 = vshrl.u32 %v298, 7
    %v300 = vsub.s32 0, %v299
    %v301 = vrot.slane %v296, %v300
    %303 = vmatprep.subr.mxu0 0.0
    %304 = vmatpush1.msra.mxu0 %v295
    %305 = vmatprep.subr.mxu0 0.0
    %306 = vmatpush1.msra.mxu0 %v294
    %307 = vmatprep.subr.mxu0 0.0
    %308 = vmatpush1.msra.mxu0 %v293
    %309 = vmatprep.subr.mxu0 0.0
    %310 = vmatpush1.msra.mxu0 %v292
    %311 = vmatprep.subr.mxu0 0.0
    %312 = vmatpush1.msra.mxu0 %v291
    %313 = vmatprep.subr.mxu0 0.0
    %314 = vmatpush1.msra.mxu0 %v290
    %315 = vmatprep.subr.mxu0 0.0
    %316 = vmatpush1.msra.mxu0 %v289
    %317 = vmatprep.subr.mxu0 0.0
    %318 = vmatpush1.msra.mxu0 %v288
    %319 = vmatprep.subr.mxu0 0.0
    %320 = vmatpush1.msra.mxu0 %v287
    %321 = vmatprep.subr.mxu0 0.0
    %322 = vmatpush1.msra.mxu0 %v286
    %323 = vmatprep.subr.mxu0 0.0
    %324 = vmatpush1.msra.mxu0 %v285
    %325 = vmatprep.subr.mxu0 0.0
    %326 = vmatpush1.msra.mxu0 %v284
    %327 = vmatprep.subr.mxu0 0.0
    %328 = vmatpush1.msra.mxu0 %v283
    %329 = vmatprep.subr.mxu0 0.0
    %330 = vmatpush1.msra.mxu0 %v282
    %331 = vmatprep.subr.mxu0 0.0
    %332 = vmatpush1.msra.mxu0 %v281
    %333 = vmatprep.subr.mxu0 0.0
    %334 = vmatpush1.msra.mxu0 %v280
    %335 = vmatprep.subr.mxu0 0.0
    %336 = vmatpush2.msra.mxu0 0.0
    %337 = vmatprep.subr.mxu0 0.0
    %338 = vmatpush2.msra.mxu0 0.0
    %339 = vmatprep.subr.mxu0 0.0
    %340 = vmatpush2.msra.mxu0 0.0
    %341 = vmatprep.subr.mxu0 0.0
    %342 = vmatpush2.msra.mxu0 0.0
    %343 = vmatprep.subr.mxu0 0.0
    %344 = vmatpush2.msra.mxu0 0.0
    %345 = vmatprep.subr.mxu0 0.0
    %346 = vmatpush2.msra.mxu0 0.0
    %347 = vmatprep.subr.mxu0 0.0
    %348 = vmatpush2.msra.mxu0 0.0
    %349 = vmatprep.subr.mxu0 0.0
    %350 = vmatpush2.msra.mxu0 0.0
    %351 = vmatprep.subr.mxu0 0.0
    %352 = vmatpush2.msra.mxu0 0.0
    %353 = vmatprep.subr.mxu0 0.0
    %354 = vmatpush2.msra.mxu0 0.0
    %355 = vmatprep.subr.mxu0 0.0
    %356 = vmatpush2.msra.mxu0 0.0
    %357 = vmatprep.subr.mxu0 0.0
    %358 = vmatpush2.msra.mxu0 0.0
    %359 = vmatprep.subr.mxu0 0.0
    %360 = vmatpush2.msra.mxu0 0.0
    %361 = vmatprep.subr.mxu0 0.0
    %362 = vmatpush2.msra.mxu0 0.0
    %363 = vmatprep.subr.mxu0 0.0
    %364 = vmatpush2.msra.mxu0 0.0
    %365 = vmatprep.subr.mxu0 0.0
    %366 = vmatpush2.msra.mxu0 0.0
    %367 = vmatprep.mubr.f32.mxu0 0.0
    %368 = vmatmul.mubr.f32.gmra.mxu0 %v279
    %v369 = vpop.f32.mrf.mxu0
    %v370 = vadd.f32 %v301, %v369
    %v371 = vpop.f32.mrf.mxu0
    %372 = vdwg.mxu0
    %373 = vst [vmem:[#allocation13] sm:$0xff] %v370
    // Predicated region
    $region58: #{mlp_forward.1} parent=1 // pred_check
      _
    $region59: #{mlp_forward.1} parent=1 // pred_check_branch
      %375 = sbr.rel (0) target = $region61
    $region60: #{mlp_forward.1} parent=1 // pred_region
      %s377 = ssub.s32 128, 128
      %378 = vsyncadd [#allocation4], %s377
      %s380 = sshll.u32 [#allocation13], 4
      %s381 = int_to_ptr.vmem [resolvable:$true] %s380
      %383 = dma.vmem_to_hbm [thread:$0]  %s381, 128, %s8, [#allocation4]
    $region61: #{mlp_forward.1} parent=1 // pred_fallthru
      _
    // Predicated region
    $region62: #{mlp_forward.1} parent=1 // pred_check
      _
    $region63: #{mlp_forward.1} parent=1 // pred_check_branch
      %385 = sbr.rel (0) target = $region65
    $region64: #{mlp_forward.1} parent=1 // pred_region
      %386 = dma.done [#allocation4], 128
    $region65: #{mlp_forward.1} parent=1 // pred_fallthru
      _
    %387 = vsyncpa [#allocation3], 1
    %388 = vsyncpa [#allocation6], 1
    %389 = vsyncpa [#allocation9], 1
    %390 = vsyncpa [#allocation12], 1
    %391 = vsyncpa [#allocation4], 1

</llo_original>
